<compile_context>
chip_gen: v7x
topology: tpu7x:2x2x1
jax: 0.10.0
libtpu: 0.0.40
codegen_flags: <defaults>
</compile_context>

<pallas_src>
import functools

import jax
import jax.numpy as jnp
from jax.experimental import pallas as pl
from jax.experimental.pallas import tpu as pltpu


def _round_up(x, m):
    return ((x + m - 1) // m) * m


def hypernet_kernel(z_ref, w1_ref, b1_ref, wh_ref, bh_ref, out_ref):
    """One batch tile.

    z_ref  : (TB, genome_dim)        bf16
    w1_ref : (genome_dim, hidden)    bf16   (VMEM-resident across batch tiles)
    b1_ref : (1, hidden)             f32
    wh_ref : (hidden, head_padded)   bf16   fused [Ww | Wb | zero-pad]
    bh_ref : (1, head_padded)        f32    fused [bw | bb | zero-pad]
    out_ref: (TB, head_padded)       f32    fused [w_flat | b_out | pad]
    """
    # h = relu(z @ W1 + b1)   -- bf16 MXU inputs, f32 accumulation / epilogue.
    h = jnp.dot(z_ref[...], w1_ref[...], preferred_element_type=jnp.float32)
    h = jnp.maximum(h + b1_ref[...], 0.0)

    # Fused head: [w_flat | b_out] = h @ [Ww | Wb] + [bw | bb]   (lane-dense store)
    y = jnp.dot(h.astype(wh_ref.dtype), wh_ref[...],
                preferred_element_type=jnp.float32)
    out_ref[...] = (y + bh_ref[...]).astype(out_ref.dtype)


def fuse_params(params):
    """One-time prep: fuse fc_w/fc_b, pad head to a lane-dense width, cast weights to bf16."""
    w1, b1 = params["w1"], params["b1"]
    ww, bw = params["ww"], params["bw"]
    wb, bb = params["wb"], params["bb"]

    hidden = w1.shape[1]
    flat_out = ww.shape[1]
    target_out = wb.shape[1]
    target_in = flat_out // target_out

    head_w = flat_out + target_out                       # 512 + 16 = 528
    head_padded = _round_up(head_w, 128)                 # -> 640 (fully lane-dense)

    w_head = jnp.concatenate([ww, wb], axis=1)           # (hidden, 528)
    b_head = jnp.concatenate([bw, bb], axis=1)           # (1, 528)
    w_head = jnp.pad(w_head, ((0, 0), (0, head_padded - head_w)))
    b_head = jnp.pad(b_head, ((0, 0), (0, head_padded - head_w)))

    return {
        "w1": w1.astype(jnp.bfloat16),                   # (genome, hidden) bf16
        "b1": b1.astype(jnp.float32),                    # (1, hidden)      f32
        "w_head": w_head.astype(jnp.bfloat16),           # (hidden, 640)    bf16
        "b_head": b_head.astype(jnp.float32),            # (1, 640)         f32
        "hidden": hidden,
        "flat_out": flat_out,
        "target_out": target_out,
        "target_in": target_in,
        "head_padded": head_padded,
    }


@functools.partial(jax.jit, static_argnames=("batch_tile",))
def _hypernet_pallas(z_bf16, w1, b1, w_head, b_head, *, batch_tile):
    padded_b, genome_dim = z_bf16.shape
    hidden = w1.shape[1]
    head_padded = w_head.shape[1]
    n_tiles = padded_b // batch_tile

    # Advisory cost estimate for XLA's scheduler.
    flops = 2 * padded_b * (genome_dim * hidden + hidden * head_padded)
    bytes_accessed = (z_bf16.size * 2 + w1.size * 2 + b1.size * 4
                      + w_head.size * 2 + b_head.size * 4
                      + padded_b * head_padded * 4)

    return pl.pallas_call(
        hypernet_kernel,
        out_shape=jax.ShapeDtypeStruct((padded_b, head_padded), jnp.float32),
        grid=(n_tiles,),
        in_specs=[
            pl.BlockSpec((batch_tile, genome_dim), lambda i: (i, 0)),  # z tiles pipeline
            pl.BlockSpec((genome_dim, hidden), lambda i: (0, 0)),      # weights resident
            pl.BlockSpec((1, hidden), lambda i: (0, 0)),
            pl.BlockSpec((hidden, head_padded), lambda i: (0, 0)),
            pl.BlockSpec((1, head_padded), lambda i: (0, 0)),
        ],
        out_specs=pl.BlockSpec((batch_tile, head_padded), lambda i: (i, 0)),
        compiler_params=pltpu.CompilerParams(
            dimension_semantics=("parallel",),        # v7x: shard batch tiles over 2 TCs
        ),
        cost_estimate=pl.CostEstimate(
            flops=flops, transcendentals=0, bytes_accessed=bytes_accessed),
    )(z_bf16, w1, b1, w_head, b_head)


def hypernetwork_forward(z, fused, *, batch_tile=512):
    """z: (B, genome_dim) f32. Returns (W: (B, target_out, target_in) f32, b: (B, target_out) f32)."""
    B = z.shape[0]
    flat_out = fused["flat_out"]
    target_out = fused["target_out"]
    target_in = fused["target_in"]

    # Batch tile: multiple of 8 sublanes; small batches collapse to one tile.
    # (Tile working set is tiny — a few hundred KiB even at TB=512 — well under the
    #  v7x 32 MiB scoped-VMEM default, so no vmem_limit_bytes override is needed.)
    tb = min(batch_tile, _round_up(B, 8))
    padded_b = _round_up(B, tb)

    z_bf16 = z.astype(jnp.bfloat16)
    if padded_b != B:
        z_bf16 = jnp.pad(z_bf16, ((0, padded_b - B), (0, 0)))

    out = _hypernet_pallas(z_bf16, fused["w1"], fused["b1"],
                           fused["w_head"], fused["b_head"], batch_tile=tb)

    # Split fused lane-dense output (same column order as the concat in fuse_params).
    w_flat = out[:B, :flat_out]
    b_out = out[:B, flat_out:flat_out + target_out]
    W = w_flat.reshape(B, target_out, target_in)
    return W, b_out


def init_params(key, genome_dim=128, hidden_dim=64, target_in=32, target_out=16):
    """nn.Linear-style init: U(-1/sqrt(fan_in), 1/sqrt(fan_in)); weights stored [in, out]."""
    ks = jax.random.split(key, 6)

    def lin(kw, kb, fan_in, fan_out):
        bound = 1.0 / jnp.sqrt(fan_in)
        w = jax.random.uniform(kw, (fan_in, fan_out), jnp.float32, -bound, bound)
        b = jax.random.uniform(kb, (1, fan_out), jnp.float32, -bound, bound)
        return w, b

    w1, b1 = lin(ks[0], ks[1], genome_dim, hidden_dim)
    ww, bw = lin(ks[2], ks[3], hidden_dim, target_out * target_in)
    wb, bb = lin(ks[4], ks[5], hidden_dim, target_out)
    return {"w1": w1, "b1": b1, "ww": ww, "bw": bw, "wb": wb, "bb": bb}


def reference_forward(z, params):
    """Pure-JAX f32 reference (matches the PyTorch module)."""
    h = jnp.maximum(z @ params["w1"] + params["b1"], 0.0)
    w_flat = h @ params["ww"] + params["bw"]
    b_out = h @ params["wb"] + params["bb"]
    B = z.shape[0]
    target_out = params["wb"].shape[1]
    return w_flat.reshape(B, target_out, -1), b_out


if __name__ == "__main__":
    key = jax.random.PRNGKey(0)
    k_params, k_z = jax.random.split(key)

    genome_dim, hidden_dim, target_in, target_out = 128, 64, 32, 16
    batch = 2

    raw_params = init_params(k_params, genome_dim, hidden_dim, target_in, target_out)
    fused = fuse_params(raw_params)
    z = jax.random.normal(k_z, (batch, genome_dim), jnp.float32)

    W, b = hypernetwork_forward(z, fused)
    jax.block_until_ready((W, b))

    # Correctness vs. f32 reference (loosened tolerance: bf16 MXU operands, f32 accum).
    W_ref, b_ref = reference_forward(z, raw_params)
    assert W.shape == (batch, target_out, target_in), W.shape
    assert b.shape == (batch, target_out), b.shape
    assert jnp.allclose(W, W_ref, atol=2e-2, rtol=2e-2), float(jnp.max(jnp.abs(W - W_ref)))
    assert jnp.allclose(b, b_ref, atol=2e-2, rtol=2e-2), float(jnp.max(jnp.abs(b - b_ref)))

    print("KERNEL_OK")
</pallas_src>

<mosaic_0001>
module attributes {stable_mosaic.version = 11 : i64} {
  func.func @hypernet_kernel(%arg0: i32, %arg1: memref<8x128xbf16, #tpu.memory_space<vmem>>, %arg2: memref<128x64xbf16, #tpu.memory_space<vmem>>, %arg3: memref<1x64xf32, #tpu.memory_space<vmem>>, %arg4: memref<64x640xbf16, #tpu.memory_space<vmem>>, %arg5: memref<1x640xf32, #tpu.memory_space<vmem>>, %arg6: memref<8x640xf32, #tpu.memory_space<vmem>>) attributes {dimension_semantics = [#tpu.dimension_semantics<parallel>], iteration_bounds = array<i64: 1>, scalar_prefetch = 0 : i64, scratch_operands = 0 : i64, tpu.core_type = #tpu.core_type<tc>, window_params = [{transform_indices = @transform_0, window_bounds = array<i64: 8, 128>}, {pipeline_mode = #tpu.pipeline_mode<synchronous>, transform_indices = @transform_1, window_bounds = array<i64: 128, 64>}, {pipeline_mode = #tpu.pipeline_mode<synchronous>, transform_indices = @transform_2, window_bounds = array<i64: 1, 64>}, {pipeline_mode = #tpu.pipeline_mode<synchronous>, transform_indices = @transform_3, window_bounds = array<i64: 64, 640>}, {pipeline_mode = #tpu.pipeline_mode<synchronous>, transform_indices = @transform_4, window_bounds = array<i64: 1, 640>}, {transform_indices = @transform_5, window_bounds = array<i64: 8, 640>}]} {
    %c0 = arith.constant 0 : index
    %c0_0 = arith.constant 0 : index
    %0 = vector.load %arg1[%c0, %c0_0] : memref<8x128xbf16, #tpu.memory_space<vmem>>, vector<8x128xbf16>
    %c0_1 = arith.constant 0 : index
    %c0_2 = arith.constant 0 : index
    %1 = vector.load %arg2[%c0_1, %c0_2] : memref<128x64xbf16, #tpu.memory_space<vmem>>, vector<128x64xbf16>
    %cst = arith.constant dense<0.000000e+00> : vector<8x64xf32>
    %2 = tpu.matmul %0, %1, %cst {dimension_numbers = #tpu.dot_dimension_numbers<[1], [0], [0], [1], [0, 0, 1, 1], [], []>} : vector<8x128xbf16>, vector<128x64xbf16>, vector<8x64xf32> -> vector<8x64xf32>
    %c0_3 = arith.constant 0 : index
    %c0_4 = arith.constant 0 : index
    %3 = vector.load %arg3[%c0_3, %c0_4] : memref<1x64xf32, #tpu.memory_space<vmem>>, vector<1x64xf32>
    %4 = vector.broadcast %3 : vector<1x64xf32> to vector<8x64xf32>
    %5 = arith.addf %2, %4 : vector<8x64xf32>
    %cst_5 = arith.constant 0.000000e+00 : f32
    %6 = vector.broadcast %cst_5 : f32 to vector<8x64xf32>
    %7 = arith.maximumf %5, %6 : vector<8x64xf32>
    %8 = arith.truncf %7 : vector<8x64xf32> to vector<8x64xbf16>
    %c0_6 = arith.constant 0 : index
    %c0_7 = arith.constant 0 : index
    %9 = vector.load %arg4[%c0_6, %c0_7] : memref<64x640xbf16, #tpu.memory_space<vmem>>, vector<64x640xbf16>
    %cst_8 = arith.constant dense<0.000000e+00> : vector<8x640xf32>
    %10 = tpu.matmul %8, %9, %cst_8 {dimension_numbers = #tpu.dot_dimension_numbers<[1], [0], [0], [1], [0, 0, 1, 1], [], []>} : vector<8x64xbf16>, vector<64x640xbf16>, vector<8x640xf32> -> vector<8x640xf32>
    %c0_9 = arith.constant 0 : index
    %c0_10 = arith.constant 0 : index
    %11 = vector.load %arg5[%c0_9, %c0_10] : memref<1x640xf32, #tpu.memory_space<vmem>>, vector<1x640xf32>
    %12 = vector.broadcast %11 : vector<1x640xf32> to vector<8x640xf32>
    %13 = arith.addf %10, %12 : vector<8x640xf32>
    %c0_11 = arith.constant 0 : index
    %c0_12 = arith.constant 0 : index
    %14 = vector.load %arg6[%c0_11, %c0_12] : memref<8x640xf32, #tpu.memory_space<vmem>>, vector<8x640xf32>
    tpu.vector_store %arg6[%c0_11, %c0_12], %13 {strides = array<i32>} : memref<8x640xf32, #tpu.memory_space<vmem>>, vector<8x640xf32>,
    return
  }
  func.func @transform_0(%arg0: i32) -> (i32, i32) {
    %c0_i32 = arith.constant 0 : i32
    %c0_i32_0 = arith.constant 0 : i32
    return %arg0, %c0_i32 : i32, i32
  }
  func.func @transform_1(%arg0: i32) -> (i32, i32) {
    %c0_i32 = arith.constant 0 : i32
    %c0_i32_0 = arith.constant 0 : i32
    %c0_i32_1 = arith.constant 0 : i32
    return %c0_i32, %c0_i32_0 : i32, i32
  }
  func.func @transform_2(%arg0: i32) -> (i32, i32) {
    %c0_i32 = arith.constant 0 : i32
    %c0_i32_0 = arith.constant 0 : i32
    %c0_i32_1 = arith.constant 0 : i32
    return %c0_i32, %c0_i32_0 : i32, i32
  }
  func.func @transform_3(%arg0: i32) -> (i32, i32) {
    %c0_i32 = arith.constant 0 : i32
    %c0_i32_0 = arith.constant 0 : i32
    %c0_i32_1 = arith.constant 0 : i32
    return %c0_i32, %c0_i32_0 : i32, i32
  }
  func.func @transform_4(%arg0: i32) -> (i32, i32) {
    %c0_i32 = arith.constant 0 : i32
    %c0_i32_0 = arith.constant 0 : i32
    %c0_i32_1 = arith.constant 0 : i32
    return %c0_i32, %c0_i32_0 : i32, i32
  }
  func.func @transform_5(%arg0: i32) -> (i32, i32) {
    %c0_i32 = arith.constant 0 : i32
    %c0_i32_0 = arith.constant 0 : i32
    return %arg0, %c0_i32 : i32, i32
  }
}

</mosaic_0001>

<llo_original>
// kernel: _hypernet_pallas.1
$region0: #{_hypernet_pallas.1}
  #allocation0 [shape = 'u32[]', space=smem, size = 0x4, offset = 0x4, fixed_abs, tag = 'smem constant byte address 0x4 - core index']
  #allocation1 [shape = 'u32[144,128]{1,0:T(1,128)}', space=vmem, size = 0x12000, scoped, tag = 'internal scratch']
  %s0 = inlined_call_operand.vmem [shape: bf16[8,128], index: 0, kind: input, shape index: {}]
  %s1 = inlined_call_operand.vmem [shape: bf16[128,64], index: 1, kind: input, shape index: {}]
  %s2 = inlined_call_operand.vmem [shape: f32[1,64], index: 2, kind: input, shape index: {}]
  %s3 = inlined_call_operand.hbm [shape: bf16[64,640], index: 3, kind: input, shape index: {}]
  %s4 = inlined_call_operand.vmem [shape: f32[1,640], index: 4, kind: input, shape index: {}]
  %s5 = inlined_call_operand.hbm [shape: f32[8,640], index: 5, kind: output, shape index: {}]
  %s6 = sld [smem:[#allocation0]]
  $region34: #{_hypernet_pallas.1} parent=0
    _
  %s8 = ssub.s32 1, %s6
  %s9 = scalar_select 0, %s8, %s6
  $region1: #{_hypernet_pallas.1} parent=0
    #allocation2 [shape = 'u8[81920]{0}', space=vmem, size = 0x14000, scoped, tag = 'input window, operand 3, single buffered']
    #allocation3 [shape = 's32[1]{0}', space=sflag, size = 0x4, scoped, tag = 'scoped memory for _hypernet_pallas.1']
    #allocation4 [shape = 's32[1]{0}', space=sflag, size = 0x4, scoped, tag = 'scoped memory for _hypernet_pallas.1']
    #allocation5 [shape = 'u8[20480]{0}', space=vmem, size = 0x5000, scoped, tag = 'output window, operand 0, single buffered']
    %10 = vsyncpa [#allocation3], 0
    %11 = vsyncpa [#allocation4], 0
    // Predicated region
    $region2: #{_hypernet_pallas.1} parent=1 // pred_check
      _
    $region3: #{_hypernet_pallas.1} parent=1 // pred_check_branch
      %13 = sbr.rel (0) target = $region5
    $region4: #{_hypernet_pallas.1} parent=1 // pred_region
      _
    $region5: #{_hypernet_pallas.1} parent=1 // pred_fallthru
      _
    // Predicated region
    $region6: #{_hypernet_pallas.1} parent=1 // pred_check
      _
    $region7: #{_hypernet_pallas.1} parent=1 // pred_check_branch
      %15 = sbr.rel (0) target = $region9
    $region8: #{_hypernet_pallas.1} parent=1 // pred_region
      _
    $region9: #{_hypernet_pallas.1} parent=1 // pred_fallthru
      _
    // Predicated region
    $region10: #{_hypernet_pallas.1} parent=1 // pred_check
      _
    $region11: #{_hypernet_pallas.1} parent=1 // pred_check_branch
      %17 = sbr.rel (0) target = $region13
    $region12: #{_hypernet_pallas.1} parent=1 // pred_region
      _
    $region13: #{_hypernet_pallas.1} parent=1 // pred_fallthru
      _
    // Predicated region
    $region14: #{_hypernet_pallas.1} parent=1 // pred_check
      _
    $region15: #{_hypernet_pallas.1} parent=1 // pred_check_branch
      %19 = sbr.rel (0) target = $region17
    $region16: #{_hypernet_pallas.1} parent=1 // pred_region
      %s21 = ssub.s32 2560, 2560
      %22 = vsyncadd [#allocation3], %s21
      %s23 = sshll.u32 [#allocation2], 4
      %s24 = int_to_ptr.vmem [resolvable:$true] %s23
      %29 = dma.hbm_to_vmem [thread:$0]  %s3, 2560, %s24, [#allocation3], 320, 320, 20
    $region17: #{_hypernet_pallas.1} parent=1 // pred_fallthru
      _
    // Predicated region
    $region18: #{_hypernet_pallas.1} parent=1 // pred_check
      _
    $region19: #{_hypernet_pallas.1} parent=1 // pred_check_branch
      %31 = sbr.rel (0) target = $region21
    $region20: #{_hypernet_pallas.1} parent=1 // pred_region
      _
    $region21: #{_hypernet_pallas.1} parent=1 // pred_fallthru
      _
    // Predicated region
    $region22: #{_hypernet_pallas.1} parent=1 // pred_check
      _
    $region23: #{_hypernet_pallas.1} parent=1 // pred_check_branch
      %33 = sbr.rel (0) target = $region25
    $region24: #{_hypernet_pallas.1} parent=1 // pred_region
      %34 = dma.done [#allocation3], 2560
    $region25: #{_hypernet_pallas.1} parent=1 // pred_fallthru
      _
    %v36 = vld [vmem:[%s0] sm:$0xf]
    %v37 = vld [vmem:[%s1] sm:$0xf]
    %v38 = vld [vmem:[%s1 + $0x4] sm:$0xf]
    %v39 = vld [vmem:[%s1 + $0x8] sm:$0xf]
    %v40 = vld [vmem:[%s1 + $0xc] sm:$0xf]
    %v41 = vld [vmem:[%s1 + $0x10] sm:$0xf]
    %v42 = vld [vmem:[%s1 + $0x14] sm:$0xf]
    %v43 = vld [vmem:[%s1 + $0x18] sm:$0xf]
    %v44 = vld [vmem:[%s1 + $0x1c] sm:$0xf]
    %v45 = vld [vmem:[%s1 + $0x20] sm:$0xf]
    %v46 = vld [vmem:[%s1 + $0x24] sm:$0xf]
    %v47 = vld [vmem:[%s1 + $0x28] sm:$0xf]
    %v48 = vld [vmem:[%s1 + $0x2c] sm:$0xf]
    %v49 = vld [vmem:[%s1 + $0x30] sm:$0xf]
    %v50 = vld [vmem:[%s1 + $0x34] sm:$0xf]
    %v51 = vld [vmem:[%s1 + $0x38] sm:$0xf]
    %v52 = vld [vmem:[%s1 + $0x3c] sm:$0xf]
    %v53 = vld [vmem:[%s2] sm:$0x1]
    %v55 = vlaneseq
    %v56 = vshrl.u32 %v55, 7
    %v57 = vsub.s32 0, %v56
    %v58 = vrot.slane %v53, %v57
    %v76 = vunpack.c.l.b16 %v37
    %v77 = vunpack.c.l.b16 %v38
    %v78 = vunpack.c.l.b16 %v39
    %v79 = vunpack.c.l.b16 %v40
    %v80 = vunpack.c.l.b16 %v41
    %v81 = vunpack.c.l.b16 %v42
    %v82 = vunpack.c.l.b16 %v43
    %v83 = vunpack.c.l.b16 %v44
    %v84 = vunpack.c.l.b16 %v45
    %v85 = vunpack.c.l.b16 %v46
    %v86 = vunpack.c.l.b16 %v47
    %v87 = vunpack.c.l.b16 %v48
    %v88 = vunpack.c.l.b16 %v49
    %v89 = vunpack.c.l.b16 %v50
    %v90 = vunpack.c.l.b16 %v51
    %v91 = vunpack.c.l.b16 %v52
    %v92 = vpack.c.b16 %v77, %v76
    %v93 = vpack.c.b16 %v79, %v78
    %v94 = vpack.c.b16 %v81, %v80
    %v95 = vpack.c.b16 %v83, %v82
    %v96 = vpack.c.b16 %v85, %v84
    %v97 = vpack.c.b16 %v87, %v86
    %v98 = vpack.c.b16 %v89, %v88
    %v99 = vpack.c.b16 %v91, %v90
    %108 = vmatprep.subr.bf16.mxu0 0
    %109 = vmatpush1.bf16.msra.mxu0 %v92
    %110 = vmatprep.subr.bf16.mxu0 0
    %111 = vmatpush1.bf16.msra.mxu0 %v93
    %112 = vmatprep.subr.bf16.mxu0 0
    %113 = vmatpush1.bf16.msra.mxu0 %v94
    %114 = vmatprep.subr.bf16.mxu0 0
    %115 = vmatpush1.bf16.msra.mxu0 %v95
    %116 = vmatprep.subr.bf16.mxu0 0
    %117 = vmatpush1.bf16.msra.mxu0 %v96
    %118 = vmatprep.subr.bf16.mxu0 0
    %119 = vmatpush1.bf16.msra.mxu0 %v97
    %120 = vmatprep.subr.bf16.mxu0 0
    %121 = vmatpush1.bf16.msra.mxu0 %v98
    %122 = vmatprep.subr.bf16.mxu0 0
    %123 = vmatpush1.bf16.msra.mxu0 %v99
    %124 = vmatprep.subr.bf16.mxu0 0
    %125 = vmatpush1.bf16.msra.mxu0 0
    %126 = vmatprep.subr.bf16.mxu0 0
    %127 = vmatpush1.bf16.msra.mxu0 0
    %128 = vmatprep.subr.bf16.mxu0 0
    %129 = vmatpush1.bf16.msra.mxu0 0
    %130 = vmatprep.subr.bf16.mxu0 0
    %131 = vmatpush1.bf16.msra.mxu0 0
    %132 = vmatprep.subr.bf16.mxu0 0
    %133 = vmatpush1.bf16.msra.mxu0 0
    %134 = vmatprep.subr.bf16.mxu0 0
    %135 = vmatpush1.bf16.msra.mxu0 0
    %136 = vmatprep.subr.bf16.mxu0 0
    %137 = vmatpush1.bf16.msra.mxu0 0
    %138 = vmatprep.subr.bf16.mxu0 0
    %139 = vmatpush1.bf16.msra.mxu0 0
    %140 = vmatprep.mubr.bf16.mxu0 0
    %141 = vmatmul.mubr.bf16.gmra.mrb[0].mxu0 %v36
    %v142 = vpop.f32.mrb[0].mxu0
    %v143 = vadd.f32 %v58, %v142
    %v144 = vpop.f32.mrb[0].mxu0
    %v145 = vpop.f32.mrb[0].mxu0
    %v146 = vpop.f32.mrb[0].mxu0
    %147 = vdwg.mxu0
    %v148 = vmax.f32 %v143, 0.0
    %v149 = vpack.c.bf16 %v148, %v148
    %v150 = vld [vmem:[#allocation2] sm:$0xff]
    %v151 = vld [vmem:[#allocation2 + $0x8] sm:$0xff]
    %v152 = vld [vmem:[#allocation2 + $0x10] sm:$0xf]
    %v153 = vld [vmem:[#allocation2 + $0x14] sm:$0xff]
    %v154 = vld [vmem:[#allocation2 + $0x1c] sm:$0xff]
    %v155 = vld [vmem:[#allocation2 + $0x24] sm:$0xf]
    %v156 = vld [vmem:[#allocation2 + $0x28] sm:$0xff]
    %v157 = vld [vmem:[#allocation2 + $0x30] sm:$0xff]
    %v158 = vld [vmem:[#allocation2 + $0x38] sm:$0xf]
    %v159 = vld [vmem:[#allocation2 + $0x3c] sm:$0xff]
    %v160 = vld [vmem:[#allocation2 + $0x44] sm:$0xff]
    %v161 = vld [vmem:[#allocation2 + $0x4c] sm:$0xf]
    %v162 = vld [vmem:[#allocation2 + $0x50] sm:$0xff]
    %v163 = vld [vmem:[#allocation2 + $0x58] sm:$0xff]
    %v164 = vld [vmem:[#allocation2 + $0x60] sm:$0xf]
    %v165 = vld [vmem:[#allocation2 + $0x64] sm:$0xff]
    %v166 = vld [vmem:[#allocation2 + $0x6c] sm:$0xff]
    %v167 = vld [vmem:[#allocation2 + $0x74] sm:$0xf]
    %v168 = vld [vmem:[#allocation2 + $0x78] sm:$0xff]
    %v169 = vld [vmem:[#allocation2 + $0x80] sm:$0xff]
    %v170 = vld [vmem:[#allocation2 + $0x88] sm:$0xf]
    %v171 = vld [vmem:[#allocation2 + $0x8c] sm:$0xff]
    %v172 = vld [vmem:[#allocation2 + $0x94] sm:$0xff]
    %v173 = vld [vmem:[#allocation2 + $0x9c] sm:$0xf]
    %v174 = vld [vmem:[%s4] sm:$0x1f]
    %v176 = vlaneseq
    %v177 = vshrl.u32 %v176, 7
    %v178 = vsub.s32 0, %v177
    %v179 = vrot.slane %v174, %v178
    %v180 = vlaneseq
    %v181 = vshrl.u32 %v180, 7
    %v182 = vsub.s32 1, %v181
    %v183 = vrot.slane %v174, %v182
    %v184 = vlaneseq
    %v185 = vshrl.u32 %v184, 7
    %v186 = vsub.s32 2, %v185
    %v187 = vrot.slane %v174, %v186
    %v188 = vlaneseq
    %v189 = vshrl.u32 %v188, 7
    %v190 = vsub.s32 3, %v189
    %v191 = vrot.slane %v174, %v190
    %v192 = vlaneseq
    %v193 = vshrl.u32 %v192, 7
    %v194 = vsub.s32 4, %v193
    %v195 = vrot.slane %v174, %v194
    %v225 = vunpack.c.l.b16 %v150
    %v226 = vunpack.c.h.b16 %v150
    %v227 = vunpack.c.l.b16 %v151
    %v228 = vunpack.c.h.b16 %v151
    %v229 = vunpack.c.l.b16 %v152
    %v230 = vunpack.c.l.b16 %v153
    %v231 = vunpack.c.h.b16 %v153
    %v232 = vunpack.c.l.b16 %v154
    %v233 = vunpack.c.h.b16 %v154
    %v234 = vunpack.c.l.b16 %v155
    %v235 = vunpack.c.l.b16 %v156
    %v236 = vunpack.c.h.b16 %v156
    %v237 = vunpack.c.l.b16 %v157
    %v238 = vunpack.c.h.b16 %v157
    %v239 = vunpack.c.l.b16 %v158
    %v240 = vunpack.c.l.b16 %v159
    %v241 = vunpack.c.h.b16 %v159
    %v242 = vunpack.c.l.b16 %v160
    %v243 = vunpack.c.h.b16 %v160
    %v244 = vunpack.c.l.b16 %v161
    %v245 = vunpack.c.l.b16 %v162
    %v246 = vunpack.c.h.b16 %v162
    %v247 = vunpack.c.l.b16 %v163
    %v248 = vunpack.c.h.b16 %v163
    %v249 = vunpack.c.l.b16 %v164
    %v250 = vunpack.c.l.b16 %v165
    %v251 = vunpack.c.h.b16 %v165
    %v252 = vunpack.c.l.b16 %v166
    %v253 = vunpack.c.h.b16 %v166
    %v254 = vunpack.c.l.b16 %v167
    %v255 = vunpack.c.l.b16 %v168
    %v256 = vunpack.c.h.b16 %v168
    %v257 = vunpack.c.l.b16 %v169
    %v258 = vunpack.c.h.b16 %v169
    %v259 = vunpack.c.l.b16 %v170
    %v260 = vunpack.c.l.b16 %v171
    %v261 = vunpack.c.h.b16 %v171
    %v262 = vunpack.c.l.b16 %v172
    %v263 = vunpack.c.h.b16 %v172
    %v264 = vunpack.c.l.b16 %v173
    %v265 = vpack.c.b16 %v230, %v225
    %v266 = vpack.c.b16 %v231, %v226
    %v267 = vpack.c.b16 %v232, %v227
    %v268 = vpack.c.b16 %v233, %v228
    %v269 = vpack.c.b16 %v234, %v229
    %v270 = vpack.c.b16 %v240, %v235
    %v271 = vpack.c.b16 %v241, %v236
    %v272 = vpack.c.b16 %v242, %v237
    %v273 = vpack.c.b16 %v243, %v238
    %v274 = vpack.c.b16 %v244, %v239
    %v275 = vpack.c.b16 %v250, %v245
    %v276 = vpack.c.b16 %v251, %v246
    %v277 = vpack.c.b16 %v252, %v247
    %v278 = vpack.c.b16 %v253, %v248
    %v279 = vpack.c.b16 %v254, %v249
    %v280 = vpack.c.b16 %v260, %v255
    %v281 = vpack.c.b16 %v261, %v256
    %v282 = vpack.c.b16 %v262, %v257
    %v283 = vpack.c.b16 %v263, %v258
    %v284 = vpack.c.b16 %v264, %v259
    %vm305 = vcmask 523264
    %v307 = vsel %vm305, %v149, 0
    %309 = vmatprep.subr.bf16.mxu0 %v266
    %310 = vmatpush1.bf16.msra.mxu0 %v265
    %311 = vmatprep.subr.bf16.mxu0 %v271
    %312 = vmatpush1.bf16.msra.mxu0 %v270
    %313 = vmatprep.subr.bf16.mxu0 %v276
    %314 = vmatpush1.bf16.msra.mxu0 %v275
    %315 = vmatprep.subr.bf16.mxu0 %v281
    %316 = vmatpush1.bf16.msra.mxu0 %v280
    %317 = vmatprep.subr.bf16.mxu0 0
    %318 = vmatpush1.bf16.msra.mxu0 0
    %319 = vmatprep.subr.bf16.mxu0 0
    %320 = vmatpush1.bf16.msra.mxu0 0
    %321 = vmatprep.subr.bf16.mxu0 0
    %322 = vmatpush1.bf16.msra.mxu0 0
    %323 = vmatprep.subr.bf16.mxu0 0
    %324 = vmatpush1.bf16.msra.mxu0 0
    %325 = vmatprep.subr.bf16.mxu0 0
    %326 = vmatpush1.bf16.msra.mxu0 0
    %327 = vmatprep.subr.bf16.mxu0 0
    %328 = vmatpush1.bf16.msra.mxu0 0
    %329 = vmatprep.subr.bf16.mxu0 0
    %330 = vmatpush1.bf16.msra.mxu0 0
    %331 = vmatprep.subr.bf16.mxu0 0
    %332 = vmatpush1.bf16.msra.mxu0 0
    %333 = vmatprep.subr.bf16.mxu0 0
    %334 = vmatpush1.bf16.msra.mxu0 0
    %335 = vmatprep.subr.bf16.mxu0 0
    %336 = vmatpush1.bf16.msra.mxu0 0
    %337 = vmatprep.subr.bf16.mxu0 0
    %338 = vmatpush1.bf16.msra.mxu0 0
    %339 = vmatprep.subr.bf16.mxu0 0
    %340 = vmatpush1.bf16.msra.mxu0 0
    %341 = vmatprep.mubr.bf16.mxu0 0
    %342 = vmatmul.mubr.bf16.gmra.mrb[0].mxu0 %v307
    %v343 = vpop.f32.mrb[0].mxu0
    %v344 = vadd.f32 %v179, %v343
    %v345 = vpop.f32.mrb[0].mxu0
    %v346 = vadd.f32 %v183, %v345
    %v347 = vpop.f32.mrb[0].mxu0
    %v348 = vpop.f32.mrb[0].mxu0
    %349 = vdwg.mxu0
    %350 = vmatprep.subr.bf16.mxu0 %v268
    %351 = vmatpush1.bf16.msra.mxu0 %v267
    %352 = vmatprep.subr.bf16.mxu0 %v273
    %353 = vmatpush1.bf16.msra.mxu0 %v272
    %354 = vmatprep.subr.bf16.mxu0 %v278
    %355 = vmatpush1.bf16.msra.mxu0 %v277
    %356 = vmatprep.subr.bf16.mxu0 %v283
    %357 = vmatpush1.bf16.msra.mxu0 %v282
    %358 = vmatprep.subr.bf16.mxu0 0
    %359 = vmatpush1.bf16.msra.mxu0 0
    %360 = vmatprep.subr.bf16.mxu0 0
    %361 = vmatpush1.bf16.msra.mxu0 0
    %362 = vmatprep.subr.bf16.mxu0 0
    %363 = vmatpush1.bf16.msra.mxu0 0
    %364 = vmatprep.subr.bf16.mxu0 0
    %365 = vmatpush1.bf16.msra.mxu0 0
    %366 = vmatprep.subr.bf16.mxu0 0
    %367 = vmatpush1.bf16.msra.mxu0 0
    %368 = vmatprep.subr.bf16.mxu0 0
    %369 = vmatpush1.bf16.msra.mxu0 0
    %370 = vmatprep.subr.bf16.mxu0 0
    %371 = vmatpush1.bf16.msra.mxu0 0
    %372 = vmatprep.subr.bf16.mxu0 0
    %373 = vmatpush1.bf16.msra.mxu0 0
    %374 = vmatprep.subr.bf16.mxu0 0
    %375 = vmatpush1.bf16.msra.mxu0 0
    %376 = vmatprep.subr.bf16.mxu0 0
    %377 = vmatpush1.bf16.msra.mxu0 0
    %378 = vmatprep.subr.bf16.mxu0 0
    %379 = vmatpush1.bf16.msra.mxu0 0
    %380 = vmatprep.subr.bf16.mxu0 0
    %381 = vmatpush1.bf16.msra.mxu0 0
    %382 = vmatprep.mubr.bf16.mxu0 0
    %383 = vmatmul.mubr.bf16.gmra.mrb[0].mxu0 %v307
    %v384 = vpop.f32.mrb[0].mxu0
    %v385 = vadd.f32 %v187, %v384
    %v386 = vpop.f32.mrb[0].mxu0
    %v387 = vadd.f32 %v191, %v386
    %v388 = vpop.f32.mrb[0].mxu0
    %v389 = vpop.f32.mrb[0].mxu0
    %390 = vdwg.mxu0
    %391 = vmatprep.subr.bf16.mxu0 0
    %392 = vmatpush1.bf16.msra.mxu0 %v269
    %393 = vmatprep.subr.bf16.mxu0 0
    %394 = vmatpush1.bf16.msra.mxu0 %v274
    %395 = vmatprep.subr.bf16.mxu0 0
    %396 = vmatpush1.bf16.msra.mxu0 %v279
    %397 = vmatprep.subr.bf16.mxu0 0
    %398 = vmatpush1.bf16.msra.mxu0 %v284
    %399 = vmatprep.subr.bf16.mxu0 0
    %400 = vmatpush1.bf16.msra.mxu0 0
    %401 = vmatprep.subr.bf16.mxu0 0
    %402 = vmatpush1.bf16.msra.mxu0 0
    %403 = vmatprep.subr.bf16.mxu0 0
    %404 = vmatpush1.bf16.msra.mxu0 0
    %405 = vmatprep.subr.bf16.mxu0 0
    %406 = vmatpush1.bf16.msra.mxu0 0
    %407 = vmatprep.subr.bf16.mxu0 0
    %408 = vmatpush1.bf16.msra.mxu0 0
    %409 = vmatprep.subr.bf16.mxu0 0
    %410 = vmatpush1.bf16.msra.mxu0 0
    %411 = vmatprep.subr.bf16.mxu0 0
    %412 = vmatpush1.bf16.msra.mxu0 0
    %413 = vmatprep.subr.bf16.mxu0 0
    %414 = vmatpush1.bf16.msra.mxu0 0
    %415 = vmatprep.subr.bf16.mxu0 0
    %416 = vmatpush1.bf16.msra.mxu0 0
    %417 = vmatprep.subr.bf16.mxu0 0
    %418 = vmatpush1.bf16.msra.mxu0 0
    %419 = vmatprep.subr.bf16.mxu0 0
    %420 = vmatpush1.bf16.msra.mxu0 0
    %421 = vmatprep.subr.bf16.mxu0 0
    %422 = vmatpush1.bf16.msra.mxu0 0
    %423 = vmatprep.mubr.bf16.mxu0 0
    %424 = vmatmul.mubr.bf16.gmra.mrb[0].mxu0 %v307
    %v425 = vpop.f32.mrb[0].mxu0
    %v426 = vadd.f32 %v195, %v425
    %v427 = vpop.f32.mrb[0].mxu0
    %v428 = vpop.f32.mrb[0].mxu0
    %v429 = vpop.f32.mrb[0].mxu0
    %430 = vdwg.mxu0
    %431 = vst [vmem:[#allocation5] sm:$0xff] %v344
    %432 = vst [vmem:[#allocation5 + $0x8] sm:$0xff] %v346
    %433 = vst [vmem:[#allocation5 + $0x10] sm:$0xff] %v385
    %434 = vst [vmem:[#allocation5 + $0x18] sm:$0xff] %v387
    %435 = vst [vmem:[#allocation5 + $0x20] sm:$0xff] %v426
    // Predicated region
    $region26: #{_hypernet_pallas.1} parent=1 // pred_check
      _
    $region27: #{_hypernet_pallas.1} parent=1 // pred_check_branch
      %437 = sbr.rel (0) target = $region29
    $region28: #{_hypernet_pallas.1} parent=1 // pred_region
      %s439 = ssub.s32 640, 640
      %440 = vsyncadd [#allocation4], %s439
      %s442 = sshll.u32 [#allocation5], 4
      %s443 = int_to_ptr.vmem [resolvable:$true] %s442
      %445 = dma.vmem_to_hbm [thread:$0]  %s443, 640, %s5, [#allocation4]
    $region29: #{_hypernet_pallas.1} parent=1 // pred_fallthru
      _
    // Predicated region
    $region30: #{_hypernet_pallas.1} parent=1 // pred_check
      _
    $region31: #{_hypernet_pallas.1} parent=1 // pred_check_branch
      %447 = sbr.rel (0) target = $region33
    $region32: #{_hypernet_pallas.1} parent=1 // pred_region
      %448 = dma.done [#allocation4], 640
    $region33: #{_hypernet_pallas.1} parent=1 // pred_fallthru
      _
    %449 = vsyncpa [#allocation3], 1
    %450 = vsyncpa [#allocation4], 1

</llo_original>
